<compile_context>
chip_gen: v6e
topology: v6e:2x2x1
jax: 0.10.0
libtpu: 0.0.40
codegen_flags: <defaults>
</compile_context>

<pallas_src>
import functools

import jax
import jax.numpy as jnp
from jax.experimental import pallas as pl
from jax.experimental.pallas import tpu as pltpu

_BN_EPS = 1e-5


def _round_up(x: int, m: int) -> int:
    return ((x + m - 1) // m) * m


def _bn_relu_epilogue(h, gamma, beta, o_ref, *, batch, pad_rows):
    """Train-mode BatchNorm1d (batch stats) + ReLU on a (B_pad, TN) f32 tile.

    `h` has `pad_rows` trailing all-zero rows that must not perturb the stats.
    """
    inv_b = jnp.float32(1.0 / batch)
    mean = jnp.sum(h, axis=0, keepdims=True) * inv_b          # zero rows add 0
    centered = h - mean
    ssq = jnp.sum(centered * centered, axis=0, keepdims=True)
    # Each zero-padded row contributes exactly mean**2 to ssq; remove exactly.
    var = jnp.maximum((ssq - jnp.float32(pad_rows) * mean * mean) * inv_b, 0.0)
    scale = gamma * jax.lax.rsqrt(var + _BN_EPS)
    y = centered * scale + beta
    # TODO(synk): nn.Dropout omitted (eval-mode identity); torch's train-mode
    # RNG mask is not bit-reproducible on TPU.
    o_ref[...] = jnp.maximum(y, 0.0).astype(o_ref.dtype)


def _fc_kernel_single(x_ref, w_ref, g_ref, b_ref, o_ref, *, batch, pad_rows):
    """1-D grid over N tiles; whole K reduction in one MXU call, no scratch."""
    h = jnp.dot(x_ref[...], w_ref[...], preferred_element_type=jnp.float32)
    _bn_relu_epilogue(h, g_ref[...], b_ref[...], o_ref,
                      batch=batch, pad_rows=pad_rows)


def _fc_kernel_multi(x_ref, w_ref, g_ref, b_ref, o_ref, acc_ref, *,
                     batch, pad_rows, tk, x_resident):
    """(N, K) grid; f32 accumulator; BN+ReLU epilogue at the last K step."""
    k = pl.program_id(1)

    @pl.when(k == 0)
    def _():
        acc_ref[...] = jnp.zeros_like(acc_ref)

    if x_resident:
        start = pl.multiple_of(k * tk, 128)
        x_blk = x_ref[:, pl.ds(start, tk)]
    else:
        x_blk = x_ref[...]

    acc_ref[...] += jnp.dot(x_blk, w_ref[...],
                            preferred_element_type=jnp.float32)

    @pl.when(k == pl.num_programs(1) - 1)
    def _():
        _bn_relu_epilogue(acc_ref[...], g_ref[...], b_ref[...], o_ref,
                          batch=batch, pad_rows=pad_rows)


def prepare_fc_block_params(w, gamma, beta):
    """One-time (per layer) parameter prep, hoisted out of the per-call path.

    w: (planes, inplanes) in PyTorch nn.Linear layout. The Linear bias is
    dropped: a per-feature constant added before batch-statistics BatchNorm is
    exactly cancelled by the mean subtraction.
    Returns (W^T bf16 padded, gamma f32 padded, beta f32 padded, planes).
    """
    planes, inplanes = w.shape
    k_pad = _round_up(inplanes, 128)
    n_pad = _round_up(planes, 128)
    w_t = jnp.asarray(w).T.astype(jnp.bfloat16)
    if (inplanes, planes) != (k_pad, n_pad):
        w_t = jnp.pad(w_t, ((0, k_pad - inplanes), (0, n_pad - planes)))
    g = jnp.asarray(gamma, jnp.float32).reshape(1, planes)
    b = jnp.asarray(beta, jnp.float32).reshape(1, planes)
    if planes != n_pad:
        g = jnp.pad(g, ((0, 0), (0, n_pad - planes)))
        b = jnp.pad(b, ((0, 0), (0, n_pad - planes)))
    return w_t, g, b, planes


@functools.partial(jax.jit,
                   static_argnames=("planes", "out_dtype", "allow_single_k"))
def fc_block_forward(x, w_p, gamma_p, beta_p, *, planes,
                     out_dtype=jnp.float32, allow_single_k=True):
    """x: (B, inplanes); w_p/gamma_p/beta_p from prepare_fc_block_params."""
    B, K = x.shape
    K_pad, N_pad = w_p.shape
    B_pad = _round_up(B, 16)                    # bf16 packs 2 rows per sublane
    out_isize = jnp.dtype(out_dtype).itemsize

    # Per-call input prep: bf16 cast (always needed), pad only when required.
    x_b = x.astype(jnp.bfloat16)
    if (B_pad, K_pad) != (B, K):
        x_b = jnp.pad(x_b, ((0, B_pad - B), (0, K_pad - K)))

    # --- tiling --------------------------------------------------------------
    # Keep >=2 N tiles whenever possible so v7x's two TensorCores both get work.
    TN = 256 if (N_pad % 256 == 0 and N_pad >= 512) else 128

    x_bytes = B_pad * K_pad * 2
    # Small-problem fast path: x + whole W panel comfortably resident in VMEM.
    single_k = allow_single_k and (x_bytes + 2 * K_pad * TN * 2) <= (8 << 20)

    stat_kwargs = dict(batch=float(B), pad_rows=float(B_pad - B))

    if single_k:
        grid = (N_pad // TN,)
        in_specs = [
            pl.BlockSpec((B_pad, K_pad), lambda n: (0, 0)),       # x (resident)
            pl.BlockSpec((K_pad, TN), lambda n: (0, n)),          # W panel
            pl.BlockSpec((1, TN), lambda n: (0, n)),              # gamma
            pl.BlockSpec((1, TN), lambda n: (0, n)),              # beta
        ]
        out_spec = pl.BlockSpec((B_pad, TN), lambda n: (0, n))
        scratch = []
        dim_sem = ("parallel",)
        kernel = functools.partial(_fc_kernel_single, **stat_kwargs)
        vmem_est = (x_bytes + 2 * K_pad * TN * 2
                    + 2 * B_pad * TN * out_isize + 4 * TN * 4)
    else:
        if K_pad % 512 == 0:
            TK = 512
        elif K_pad % 256 == 0:
            TK = 256
        else:
            TK = 128
        x_resident = x_bytes <= (12 << 20)        # v7x-safe residency budget

        def _est(tk):
            x_part = x_bytes if x_resident else 2 * B_pad * tk * 2
            w_bufs = 3 if (K_pad // tk) >= 3 else 2
            return (x_part + w_bufs * tk * TN * 2 + B_pad * TN * 4
                    + 2 * B_pad * TN * out_isize + 8 * TN * 4)

        while TK > 128 and _est(TK) > (48 << 20):  # v7x: 64 MiB physical VMEM
            TK //= 2
        vmem_est = _est(TK)

        grid = (N_pad // TN, K_pad // TK)
        if x_resident:
            x_spec = pl.BlockSpec((B_pad, K_pad), lambda n, k: (0, 0))
        else:
            x_spec = pl.BlockSpec((B_pad, TK), lambda n, k: (0, k))
        if K_pad // TK >= 3:                       # deepen W pipelining
            w_spec = pl.BlockSpec((TK, TN), lambda n, k: (k, n),
                                  pipeline_mode=pl.Buffered(3))
        else:
            w_spec = pl.BlockSpec((TK, TN), lambda n, k: (k, n))
        in_specs = [
            x_spec,
            w_spec,
            pl.BlockSpec((1, TN), lambda n, k: (0, n)),
            pl.BlockSpec((1, TN), lambda n, k: (0, n)),
        ]
        out_spec = pl.BlockSpec((B_pad, TN), lambda n, k: (0, n))
        scratch = [pltpu.VMEM((B_pad, TN), jnp.float32)]
        dim_sem = ("parallel", "arbitrary")
        kernel = functools.partial(_fc_kernel_multi, tk=TK,
                                   x_resident=x_resident, **stat_kwargs)

    cp_kwargs = dict(dimension_semantics=dim_sem)
    if vmem_est > (30 << 20):                      # past the default scoped limit
        cp_kwargs["vmem_limit_bytes"] = int(vmem_est + (4 << 20))

    out = pl.pallas_call(
        kernel,
        out_shape=jax.ShapeDtypeStruct((B_pad, N_pad), out_dtype),
        grid_spec=pltpu.PrefetchScalarGridSpec(
            num_scalar_prefetch=0,
            grid=grid,
            in_specs=in_specs,
            out_specs=out_spec,
            scratch_shapes=scratch,
        ),
        compiler_params=pltpu.CompilerParams(**cp_kwargs),
    )(x_b, w_p, gamma_p, beta_p)

    if (B_pad, N_pad) != (B, planes):
        out = out[:B, :planes]
    return out


def _reference(x, w, b, gamma, beta):
    """Pure-JAX fc_block (WITH the Linear bias) under the kernel's precision
    policy (bf16 matmul operands, f32 stats). Agreement validates the
    bias-cancellation identity used by the kernel."""
    h = jnp.dot(x.astype(jnp.bfloat16), w.T.astype(jnp.bfloat16),
                preferred_element_type=jnp.float32) + b
    mean = h.mean(axis=0, keepdims=True)
    var = ((h - mean) ** 2).mean(axis=0, keepdims=True)
    y = (h - mean) * jax.lax.rsqrt(var + _BN_EPS) * gamma + beta
    return jnp.maximum(y, 0.0)


if __name__ == "__main__":
    # Small shapes consistent with the module: batch=8, inplanes=32, planes=16.
    B, inplanes, planes = 8, 32, 16

    key = jax.random.PRNGKey(0)
    kx, kw, kb, kx2, kw2 = jax.random.split(key, 5)

    x = jax.random.normal(kx, (B, inplanes), dtype=jnp.float32)
    bound = 1.0 / (inplanes ** 0.5)
    w = jax.random.uniform(kw, (planes, inplanes), jnp.float32, -bound, bound)
    b = jax.random.uniform(kb, (1, planes), jnp.float32, -bound, bound)
    gamma = jnp.ones((planes,), jnp.float32)    # BatchNorm1d weight init
    beta = jnp.zeros((planes,), jnp.float32)    # BatchNorm1d bias init

    # One-time parameter prep (hoisted out of the per-call path).
    w_p, g_p, b_p, n_out = prepare_fc_block_params(w, gamma, beta)

    # 1) Small-problem fast path (single K step), f32 output.
    out = jax.block_until_ready(
        fc_block_forward(x, w_p, g_p, b_p, planes=n_out))
    ref = _reference(x, w, b, gamma.reshape(1, -1), beta.reshape(1, -1))
    assert out.shape == (B, planes)
    assert jnp.allclose(out, ref, atol=2e-3, rtol=2e-3), "single-K mismatch"

    # 2) bf16-writeback variant (halves HBM writeback / output VMEM).
    out_bf16 = jax.block_until_ready(
        fc_block_forward(x, w_p, g_p, b_p, planes=n_out,
                         out_dtype=jnp.bfloat16))
    assert jnp.allclose(out_bf16.astype(jnp.float32), ref,
                        atol=2e-2, rtol=2e-2), "bf16-out mismatch"

    # 3) Multi-K accumulator path (3 K tiles -> resident-x pl.ds slicing,
    #    Buffered(3) W pipeline, f32 scratch accumulator + epilogue).
    inplanes2 = 384
    x2 = jax.random.normal(kx2, (B, inplanes2), dtype=jnp.float32)
    bound2 = 1.0 / (inplanes2 ** 0.5)
    w2 = jax.random.uniform(kw2, (planes, inplanes2), jnp.float32,
                            -bound2, bound2)
    w2_p, g2_p, b2_p, n2 = prepare_fc_block_params(w2, gamma, beta)
    out2 = jax.block_until_ready(
        fc_block_forward(x2, w2_p, g2_p, b2_p, planes=n2,
                         allow_single_k=False))
    ref2 = _reference(x2, w2, b, gamma.reshape(1, -1), beta.reshape(1, -1))
    assert out2.shape == (B, planes)
    assert jnp.allclose(out2, ref2, atol=2e-3, rtol=2e-3), "multi-K mismatch"

    print("KERNEL_OK")
</pallas_src>

<mosaic_0001>
module attributes {stable_mosaic.version = 11 : i64} {
  func.func @_fc_kernel_single(%arg0: i32, %arg1: memref<16x128xbf16, #tpu.memory_space<vmem>>, %arg2: memref<128x128xbf16, #tpu.memory_space<vmem>>, %arg3: memref<1x128xf32, #tpu.memory_space<vmem>>, %arg4: memref<1x128xf32, #tpu.memory_space<vmem>>, %arg5: memref<16x128xf32, #tpu.memory_space<vmem>>) attributes {dimension_semantics = [#tpu.dimension_semantics<parallel>], iteration_bounds = array<i64: 1>, scalar_prefetch = 0 : i64, scratch_operands = 0 : i64, tpu.core_type = #tpu.core_type<tc>, window_params = [{pipeline_mode = #tpu.pipeline_mode<synchronous>, transform_indices = @transform_0, window_bounds = array<i64: 16, 128>}, {transform_indices = @transform_1, window_bounds = array<i64: 128, 128>}, {transform_indices = @transform_2, window_bounds = array<i64: 1, 128>}, {transform_indices = @transform_3, window_bounds = array<i64: 1, 128>}, {transform_indices = @transform_4, window_bounds = array<i64: 16, 128>}]} {
    %c0 = arith.constant 0 : index
    %c0_0 = arith.constant 0 : index
    %0 = vector.load %arg1[%c0, %c0_0] : memref<16x128xbf16, #tpu.memory_space<vmem>>, vector<16x128xbf16>
    %c0_1 = arith.constant 0 : index
    %c0_2 = arith.constant 0 : index
    %1 = vector.load %arg2[%c0_1, %c0_2] : memref<128x128xbf16, #tpu.memory_space<vmem>>, vector<128x128xbf16>
    %cst = arith.constant dense<0.000000e+00> : vector<16x128xf32>
    %2 = tpu.matmul %0, %1, %cst {dimension_numbers = #tpu.dot_dimension_numbers<[1], [0], [0], [1], [0, 0, 1, 1], [], []>} : vector<16x128xbf16>, vector<128x128xbf16>, vector<16x128xf32> -> vector<16x128xf32>
    %c0_3 = arith.constant 0 : index
    %c0_4 = arith.constant 0 : index
    %3 = vector.load %arg3[%c0_3, %c0_4] : memref<1x128xf32, #tpu.memory_space<vmem>>, vector<1x128xf32>
    %c0_5 = arith.constant 0 : index
    %c0_6 = arith.constant 0 : index
    %4 = vector.load %arg4[%c0_5, %c0_6] : memref<1x128xf32, #tpu.memory_space<vmem>>, vector<1x128xf32>
    %cst_7 = arith.constant dense<0.000000e+00> : vector<128xf32>
    %5 = vector.multi_reduction <add>, %2, %cst_7 [0] : vector<16x128xf32> to vector<128xf32>
    %6 = vector.shape_cast %5 : vector<128xf32> to vector<1x128xf32>
    %cst_8 = arith.constant 1.250000e-01 : f32
    %7 = vector.broadcast %cst_8 : f32 to vector<1x128xf32>
    %8 = arith.mulf %6, %7 : vector<1x128xf32>
    %9 = vector.broadcast %8 : vector<1x128xf32> to vector<16x128xf32>
    %10 = arith.subf %2, %9 : vector<16x128xf32>
    %11 = arith.mulf %10, %10 : vector<16x128xf32>
    %cst_9 = arith.constant dense<0.000000e+00> : vector<128xf32>
    %12 = vector.multi_reduction <add>, %11, %cst_9 [0] : vector<16x128xf32> to vector<128xf32>
    %13 = vector.shape_cast %12 : vector<128xf32> to vector<1x128xf32>
    %cst_10 = arith.constant 8.000000e+00 : f32
    %14 = vector.broadcast %cst_10 : f32 to vector<1x128xf32>
    %15 = arith.mulf %14, %8 : vector<1x128xf32>
    %16 = arith.mulf %15, %8 : vector<1x128xf32>
    %17 = arith.subf %13, %16 : vector<1x128xf32>
    %cst_11 = arith.constant 1.250000e-01 : f32
    %18 = vector.broadcast %cst_11 : f32 to vector<1x128xf32>
    %19 = arith.mulf %17, %18 : vector<1x128xf32>
    %cst_12 = arith.constant 0.000000e+00 : f32
    %20 = vector.broadcast %cst_12 : f32 to vector<1x128xf32>
    %21 = arith.maximumf %19, %20 : vector<1x128xf32>
    %cst_13 = arith.constant 9.99999974E-6 : f32
    %22 = vector.broadcast %cst_13 : f32 to vector<1x128xf32>
    %23 = arith.addf %21, %22 : vector<1x128xf32>
    %24 = math.rsqrt %23 : vector<1x128xf32>
    %25 = arith.mulf %3, %24 : vector<1x128xf32>
    %26 = vector.broadcast %25 : vector<1x128xf32> to vector<16x128xf32>
    %27 = arith.mulf %10, %26 : vector<16x128xf32>
    %28 = vector.broadcast %4 : vector<1x128xf32> to vector<16x128xf32>
    %29 = arith.addf %27, %28 : vector<16x128xf32>
    %cst_14 = arith.constant 0.000000e+00 : f32
    %30 = vector.broadcast %cst_14 : f32 to vector<16x128xf32>
    %31 = arith.maximumf %29, %30 : vector<16x128xf32>
    %c0_15 = arith.constant 0 : index
    %c0_16 = arith.constant 0 : index
    %32 = vector.load %arg5[%c0_15, %c0_16] : memref<16x128xf32, #tpu.memory_space<vmem>>, vector<16x128xf32>
    tpu.vector_store %arg5[%c0_15, %c0_16], %31 {strides = array<i32>} : memref<16x128xf32, #tpu.memory_space<vmem>>, vector<16x128xf32>,
    return
  }
  func.func @transform_0(%arg0: i32) -> (i32, i32) {
    %c0_i32 = arith.constant 0 : i32
    %c0_i32_0 = arith.constant 0 : i32
    %c0_i32_1 = arith.constant 0 : i32
    return %c0_i32, %c0_i32_0 : i32, i32
  }
  func.func @transform_1(%arg0: i32) -> (i32, i32) {
    %c0_i32 = arith.constant 0 : i32
    %c0_i32_0 = arith.constant 0 : i32
    return %c0_i32, %arg0 : i32, i32
  }
  func.func @transform_2(%arg0: i32) -> (i32, i32) {
    %c0_i32 = arith.constant 0 : i32
    %c0_i32_0 = arith.constant 0 : i32
    return %c0_i32, %arg0 : i32, i32
  }
  func.func @transform_3(%arg0: i32) -> (i32, i32) {
    %c0_i32 = arith.constant 0 : i32
    %c0_i32_0 = arith.constant 0 : i32
    return %c0_i32, %arg0 : i32, i32
  }
  func.func @transform_4(%arg0: i32) -> (i32, i32) {
    %c0_i32 = arith.constant 0 : i32
    %c0_i32_0 = arith.constant 0 : i32
    return %c0_i32, %arg0 : i32, i32
  }
}

</mosaic_0001>

<llo_original>
// kernel: fc_block_forward.1
$region0: #{fc_block_forward.1}
  #allocation0 [shape = 'u32[]', space=smem, size = 0x4, offset = 0x4, fixed_abs, tag = 'smem constant byte address 0x4 - core index']
  #allocation1 [shape = 'u32[144,128]{1,0:T(1,128)}', space=vmem, size = 0x12000, scoped, tag = 'internal scratch']
  %s0 = inlined_call_operand.vmem [shape: bf16[16,128], index: 0, kind: input, shape index: {}]
  %s1 = inlined_call_operand.hbm [shape: bf16[128,128], index: 1, kind: input, shape index: {}]
  %s2 = inlined_call_operand.vmem [shape: f32[1,128], index: 2, kind: input, shape index: {}]
  %s3 = inlined_call_operand.vmem [shape: f32[1,128], index: 3, kind: input, shape index: {}]
  %s4 = inlined_call_operand.vmem [shape: f32[16,128], index: 4, kind: output, shape index: {}]
  %s5 = sld [smem:[#allocation0]]
  $region30: #{fc_block_forward.1} parent=0
    _
  %s7 = ssub.s32 1, %s5
  %s8 = scalar_select 0, %s7, %s5
  $region1: #{fc_block_forward.1} parent=0
    #allocation2 [shape = 'u8[32768]{0}', space=vmem, size = 0x8000, scoped, tag = 'input window, operand 1, single buffered']
    #allocation3 [shape = 's32[1]{0}', space=sflag, size = 0x4, scoped, tag = 'scoped memory for fc_block_forward.1']
    %9 = vsyncpa [#allocation3], 0
    // Predicated region
    $region2: #{fc_block_forward.1} parent=1 // pred_check
      _
    $region3: #{fc_block_forward.1} parent=1 // pred_check_branch
      %11 = sbr.rel (0) target = $region5
    $region4: #{fc_block_forward.1} parent=1 // pred_region
      _
    $region5: #{fc_block_forward.1} parent=1 // pred_fallthru
      _
    // Predicated region
    $region6: #{fc_block_forward.1} parent=1 // pred_check
      _
    $region7: #{fc_block_forward.1} parent=1 // pred_check_branch
      %13 = sbr.rel (0) target = $region9
    $region8: #{fc_block_forward.1} parent=1 // pred_region
      %s15 = ssub.s32 1024, 1024
      %16 = vsyncadd [#allocation3], %s15
      %s17 = sshll.u32 [#allocation2], 4
      %s18 = int_to_ptr.vmem [resolvable:$true] %s17
      %23 = dma.hbm_to_vmem [thread:$0]  %s1, 1024, %s18, [#allocation3], 64, 64, 4
    $region9: #{fc_block_forward.1} parent=1 // pred_fallthru
      _
    // Predicated region
    $region10: #{fc_block_forward.1} parent=1 // pred_check
      _
    $region11: #{fc_block_forward.1} parent=1 // pred_check_branch
      %25 = sbr.rel (0) target = $region13
    $region12: #{fc_block_forward.1} parent=1 // pred_region
      _
    $region13: #{fc_block_forward.1} parent=1 // pred_fallthru
      _
    // Predicated region
    $region14: #{fc_block_forward.1} parent=1 // pred_check
      _
    $region15: #{fc_block_forward.1} parent=1 // pred_check_branch
      %27 = sbr.rel (0) target = $region17
    $region16: #{fc_block_forward.1} parent=1 // pred_region
      _
    $region17: #{fc_block_forward.1} parent=1 // pred_fallthru
      _
    // Predicated region
    $region18: #{fc_block_forward.1} parent=1 // pred_check
      _
    $region19: #{fc_block_forward.1} parent=1 // pred_check_branch
      %29 = sbr.rel (0) target = $region21
    $region20: #{fc_block_forward.1} parent=1 // pred_region
      %30 = dma.done [#allocation3], 1024
    $region21: #{fc_block_forward.1} parent=1 // pred_fallthru
      _
    %v32 = vld [vmem:[%s0] sm:$0xf]
    %v33 = vld [vmem:[%s0 + $0x4] sm:$0xf]
    %v34 = vld [vmem:[#allocation2] sm:$0xf]
    %v35 = vld [vmem:[#allocation2 + $0x4] sm:$0xf]
    %v36 = vld [vmem:[#allocation2 + $0x8] sm:$0xf]
    %v37 = vld [vmem:[#allocation2 + $0xc] sm:$0xf]
    %v38 = vld [vmem:[#allocation2 + $0x10] sm:$0xf]
    %v39 = vld [vmem:[#allocation2 + $0x14] sm:$0xf]
    %v40 = vld [vmem:[#allocation2 + $0x18] sm:$0xf]
    %v41 = vld [vmem:[#allocation2 + $0x1c] sm:$0xf]
    %v42 = vld [vmem:[#allocation2 + $0x20] sm:$0xf]
    %v43 = vld [vmem:[#allocation2 + $0x24] sm:$0xf]
    %v44 = vld [vmem:[#allocation2 + $0x28] sm:$0xf]
    %v45 = vld [vmem:[#allocation2 + $0x2c] sm:$0xf]
    %v46 = vld [vmem:[#allocation2 + $0x30] sm:$0xf]
    %v47 = vld [vmem:[#allocation2 + $0x34] sm:$0xf]
    %v48 = vld [vmem:[#allocation2 + $0x38] sm:$0xf]
    %v49 = vld [vmem:[#allocation2 + $0x3c] sm:$0xf]
    %v52 = vunpack.c.l.b16 %v32
    %v53 = vunpack.c.l.b16 %v33
    %v54 = vpack.c.b16 %v53, %v52
    %v72 = vunpack.c.l.b16 %v34
    %v73 = vunpack.c.l.b16 %v35
    %v74 = vunpack.c.l.b16 %v36
    %v75 = vunpack.c.l.b16 %v37
    %v76 = vunpack.c.l.b16 %v38
    %v77 = vunpack.c.l.b16 %v39
    %v78 = vunpack.c.l.b16 %v40
    %v79 = vunpack.c.l.b16 %v41
    %v80 = vunpack.c.l.b16 %v42
    %v81 = vunpack.c.l.b16 %v43
    %v82 = vunpack.c.l.b16 %v44
    %v83 = vunpack.c.l.b16 %v45
    %v84 = vunpack.c.l.b16 %v46
    %v85 = vunpack.c.l.b16 %v47
    %v86 = vunpack.c.l.b16 %v48
    %v87 = vunpack.c.l.b16 %v49
    %v88 = vpack.c.b16 %v73, %v72
    %v89 = vpack.c.b16 %v75, %v74
    %v90 = vpack.c.b16 %v77, %v76
    %v91 = vpack.c.b16 %v79, %v78
    %v92 = vpack.c.b16 %v81, %v80
    %v93 = vpack.c.b16 %v83, %v82
    %v94 = vpack.c.b16 %v85, %v84
    %v95 = vpack.c.b16 %v87, %v86
    %104 = vmatprep.subr.bf16.mxu0 0
    %105 = vmatpush1.bf16.msra.mxu0 %v95
    %106 = vmatprep.subr.bf16.mxu0 0
    %107 = vmatpush1.bf16.msra.mxu0 %v94
    %108 = vmatprep.subr.bf16.mxu0 0
    %109 = vmatpush1.bf16.msra.mxu0 %v93
    %110 = vmatprep.subr.bf16.mxu0 0
    %111 = vmatpush1.bf16.msra.mxu0 %v92
    %112 = vmatprep.subr.bf16.mxu0 0
    %113 = vmatpush1.bf16.msra.mxu0 %v91
    %114 = vmatprep.subr.bf16.mxu0 0
    %115 = vmatpush1.bf16.msra.mxu0 %v90
    %116 = vmatprep.subr.bf16.mxu0 0
    %117 = vmatpush1.bf16.msra.mxu0 %v89
    %118 = vmatprep.subr.bf16.mxu0 0
    %119 = vmatpush1.bf16.msra.mxu0 %v88
    %120 = vmatprep.subr.bf16.mxu0 0
    %121 = vmatpush2.bf16.msra.mxu0 0
    %122 = vmatprep.subr.bf16.mxu0 0
    %123 = vmatpush2.bf16.msra.mxu0 0
    %124 = vmatprep.subr.bf16.mxu0 0
    %125 = vmatpush2.bf16.msra.mxu0 0
    %126 = vmatprep.subr.bf16.mxu0 0
    %127 = vmatpush2.bf16.msra.mxu0 0
    %128 = vmatprep.subr.bf16.mxu0 0
    %129 = vmatpush2.bf16.msra.mxu0 0
    %130 = vmatprep.subr.bf16.mxu0 0
    %131 = vmatpush2.bf16.msra.mxu0 0
    %132 = vmatprep.subr.bf16.mxu0 0
    %133 = vmatpush2.bf16.msra.mxu0 0
    %134 = vmatprep.subr.bf16.mxu0 0
    %135 = vmatpush2.bf16.msra.mxu0 0
    %136 = vmatprep.mubr.bf16.mxu0 0
    %137 = vmatmul.mubr.bf16.gmra.mxu0 %v54
    %v138 = vpop.f32.mrf.mxu0
    %v139 = vadd.f32 0.0, %v138
    %v140 = vpop.f32.mrf.mxu0
    %v141 = vpop.f32.mrf.mxu0
    %v142 = vadd.f32 0.0, %v141
    %v143 = vpop.f32.mrf.mxu0
    %144 = vdwg.mxu0
    %v145 = vld [vmem:[%s2] sm:$0x1]
    %v146 = vld [vmem:[%s3] sm:$0x1]
    %v147 = vadd.f32 %v139, %v142
    %v148 = vrot.slane %v147, 4
    %v149 = vadd.f32 %v147, %v148
    %v150 = vrot.slane %v149, 2
    %v151 = vadd.f32 %v149, %v150
    %v152 = vrot.slane %v151, 1
    %v153 = vadd.f32 %v151, %v152
    %v154 = vmul.f32 %v153, 0.125
    %v155 = vsub.f32 %v139, %v154
    %v156 = vsub.f32 %v142, %v154
    %v157 = vmul.f32 %v155, %v155
    %v158 = vmul.f32 %v156, %v156
    %v159 = vadd.f32 %v157, %v158
    %v160 = vrot.slane %v159, 4
    %v161 = vadd.f32 %v159, %v160
    %v162 = vrot.slane %v161, 2
    %v163 = vadd.f32 %v161, %v162
    %v164 = vrot.slane %v163, 1
    %v165 = vadd.f32 %v163, %v164
    %v166 = vmul.f32 %v154, 8.0
    %v167 = vmul.f32 %v166, %v154
    %v168 = vsub.f32 %v165, %v167
    %v169 = vmul.f32 %v168, 0.125
    %v170 = vmax.f32 %v169, 0.0
    %v171 = vadd.f32 %v170, 1e-05
    %v172 = vrsqrt.pop %v171
    %v173 = vmul.f32 %v145, %v172
    %v175 = vlaneseq
    %v176 = vshrl.u32 %v175, 7
    %v177 = vsub.s32 0, %v176
    %v178 = vrot.slane %v173, %v177
    %v180 = vmul.f32 %v155, %v178
    %v181 = vmul.f32 %v156, %v178
    %v183 = vlaneseq
    %v184 = vshrl.u32 %v183, 7
    %v185 = vsub.s32 0, %v184
    %v186 = vrot.slane %v146, %v185
    %v188 = vadd.f32 %v180, %v186
    %v189 = vadd.f32 %v181, %v186
    %v190 = vmax.f32 %v188, 0.0
    %v191 = vmax.f32 %v189, 0.0
    %192 = vst [vmem:[%s4] sm:$0xff] %v190
    %193 = vst [vmem:[%s4 + $0x8] sm:$0xff] %v191
    // Predicated region
    $region22: #{fc_block_forward.1} parent=1 // pred_check
      _
    $region23: #{fc_block_forward.1} parent=1 // pred_check_branch
      %195 = sbr.rel (0) target = $region25
    $region24: #{fc_block_forward.1} parent=1 // pred_region
      _
    $region25: #{fc_block_forward.1} parent=1 // pred_fallthru
      _
    // Predicated region
    $region26: #{fc_block_forward.1} parent=1 // pred_check
      _
    $region27: #{fc_block_forward.1} parent=1 // pred_check_branch
      %197 = sbr.rel (0) target = $region29
    $region28: #{fc_block_forward.1} parent=1 // pred_region
      _
    $region29: #{fc_block_forward.1} parent=1 // pred_fallthru
      _
    %198 = vsyncpa [#allocation3], 1

</llo_original>
